<compile_context>
chip_gen: v7x
topology: tpu7x:2x2x1
jax: 0.10.0
libtpu: 0.0.40
codegen_flags: <defaults>
</compile_context>

<pallas_src>
import functools
import math

import jax
import jax.numpy as jnp
from jax.experimental import pallas as pl
from jax.experimental.pallas import tpu as pltpu


def rnn_classifier_kernel(
    ids_ref,       # (T*B, 1) int32 token ids, row r = t*B + b (row-major)
    pre_tab_ref,   # (V, 2H) f32  : emb_table @ [Wi2h_in | Wi2o_in] + [b_i2h | b_i2o]
    w_hh_ref,      # (H, H)  f32  : hidden half of i2h (only weight on serial chain)
    w_hid_ref,     # (H, 2H) f32  : hidden half of fused [i2h | i2o]
    wf_ref,        # (2H, O) f32  : W_o2o @ W_p   (folded o2o + predictor)
    bf_ref,        # (1, O)  f32  : b_o2o @ W_p + b_p
    logp_ref,      # (B, O)  f32 out : LogSoftmax(logits)
    *, seq_len, batch, hidden_size,
):
    T, B, H = seq_len, batch, hidden_size
    V = pre_tab_ref.shape[0]

    # --- Fused embedding gather + input projection (off the critical path). ---
    # one_hot(ids) @ pre_table  ==  emb_table[ids] @ W_in + b_in, done in one
    # MXU push (V is tiny here); no XLA gather, no dynamic indexing.
    ids = ids_ref[...]                                               # (T*B, 1)
    onehot = (jax.lax.broadcasted_iota(jnp.int32, (T * B, V), 1) == ids)
    pre_all = jnp.dot(onehot.astype(jnp.float32), pre_tab_ref[...],
                      preferred_element_type=jnp.float32)            # (T*B, 2H)
    pre = [pre_all[t * B:(t + 1) * B, :] for t in range(T)]          # T x (B, 2H)

    # sum_t pre_t: independent of the recurrence, not on the serial chain.
    sum_pre = pre[0]
    for t in range(1, T):
        sum_pre = sum_pre + pre[t]                                    # (B, 2H)

    # --- Serial recurrence: one (H,H) matmul + one add per step. ---
    w_hh = w_hh_ref[...]
    h = jnp.zeros((B, H), jnp.float32)         # encoder.initHidden(batch)
    sum_h = jnp.zeros((B, H), jnp.float32)     # sum of h_t fed into each step
    for t in range(T):
        sum_h = sum_h + h
        h = pre[t][:, :H] + jnp.dot(h, w_hh,
                                    preferred_element_type=jnp.float32)

    # --- Hoisted projections (linearity):
    #     sum_t comb_t = sum_t pre_t + (sum_t h_t) @ W_hid, then fold the
    #     mean, o2o and predictor into a single matmul. ---
    sum_comb = sum_pre + jnp.dot(sum_h, w_hid_ref[...],
                                 preferred_element_type=jnp.float32)  # (B, 2H)
    # TODO(synk): nn.Dropout(0.1) treated as identity (inference semantics).
    logits = (jnp.dot(sum_comb * (1.0 / T), wf_ref[...],
                      preferred_element_type=jnp.float32)
              + bf_ref[...])                                          # (B, O)

    # LogSoftmax(dim=1)
    m = jnp.max(logits, axis=1, keepdims=True)
    z = logits - m
    lse = jnp.log(jnp.sum(jnp.exp(z), axis=1, keepdims=True))
    logp_ref[...] = z - lse


def prepare_params(params):
    """One-time derivation of kernel-ready (folded) parameters."""
    H = params["wi2h"].shape[1]
    w_in = jnp.concatenate([params["wi2h"][:H], params["wi2o"][:H]], axis=1)   # (H, 2H)
    b_in = jnp.concatenate([params["bi2h"], params["bi2o"]], axis=1)           # (1, 2H)
    return {
        # Projected embedding table: emb @ [Wi2h_in | Wi2o_in] + [b_h | b_o].
        "pre_tab": params["embedding"].astype(jnp.float32) @ w_in + b_in,      # (V, 2H)
        "w_hh": params["wi2h"][H:],                                            # (H, H)
        "w_hid": jnp.concatenate([params["wi2h"][H:], params["wi2o"][H:]],
                                 axis=1),                                      # (H, 2H)
        "wf": params["wo2o"] @ params["wp"],                                   # (2H, O)
        "bf": params["bo2o"] @ params["wp"] + params["bp"],                    # (1, O)
    }


def classifier_forward(x, kparams):
    """x: (seq_len, batch) int32 token ids.  Returns (preds, logprobs, probs)."""
    T, B = x.shape
    H = kparams["w_hh"].shape[0]
    O = kparams["wf"].shape[1]

    ids2d = x.reshape(T * B, 1).astype(jnp.int32)

    kernel = functools.partial(rnn_classifier_kernel,
                               seq_len=T, batch=B, hidden_size=H)
    vmem = pl.BlockSpec(memory_space=pltpu.MemorySpace.VMEM)

    logp = pl.pallas_call(
        kernel,
        out_shape=jax.ShapeDtypeStruct((B, O), jnp.float32),
        in_specs=[vmem] * 6,
        out_specs=vmem,
    )(ids2d, kparams["pre_tab"], kparams["w_hh"], kparams["w_hid"],
      kparams["wf"], kparams["bf"])

    # Trivial epilogue left to XLA glue: argmax + exp.
    preds = jnp.argmax(logp, axis=1)
    probs = jnp.exp(logp)
    return preds, logp, probs


def init_params(key, dict_size, hidden, emb_size, out_size):
    """Deterministic synthetic parameters (PyTorch-like init scales)."""
    ks = jax.random.split(key, 5)

    def linear(k, fan_in, fan_out):
        k1, k2 = jax.random.split(k)
        bound = 1.0 / math.sqrt(fan_in)
        w = jax.random.uniform(k1, (fan_in, fan_out), jnp.float32, -bound, bound)
        b = jax.random.uniform(k2, (1, fan_out), jnp.float32, -bound, bound)
        return w, b

    p = {"embedding": jax.random.normal(ks[0], (dict_size, hidden), jnp.float32)}
    p["wi2h"], p["bi2h"] = linear(ks[1], 2 * hidden, hidden)
    p["wi2o"], p["bi2o"] = linear(ks[2], 2 * hidden, hidden)
    p["wo2o"], p["bo2o"] = linear(ks[3], 2 * hidden, emb_size)
    p["wp"], p["bp"] = linear(ks[4], emb_size, out_size)
    return p


def classifier_reference(x, params):
    """Pure-JAX reference (mirrors the PyTorch module) for correctness check."""
    emb_table = params["embedding"]
    seq_len, batch = x.shape
    H = emb_table.shape[1]
    hidden = jnp.zeros((batch, H), jnp.float32)
    acc = jnp.zeros((batch, params["wo2o"].shape[1]), jnp.float32)
    for i in range(seq_len):
        e = emb_table[x[i]]
        comb = jnp.concatenate([e, hidden], axis=1)
        hidden = comb @ params["wi2h"] + params["bi2h"]
        out = comb @ params["wi2o"] + params["bi2o"]
        oc = jnp.concatenate([hidden, out], axis=1)
        acc = acc + (oc @ params["wo2o"] + params["bo2o"])
    enc = acc / seq_len
    logits = enc @ params["wp"] + params["bp"]
    logp = jax.nn.log_softmax(logits, axis=1)
    return jnp.argmax(logp, axis=1), logp, jnp.exp(logp)


if __name__ == "__main__":
    # config: dictionary_size=16, hidden_size=32, embedding_size=32, output_size=8
    SEQ, BATCH, DICT, H, E, O = 8, 2, 16, 32, 32, 8

    key = jax.random.PRNGKey(0)
    k_x, k_p = jax.random.split(key)
    x = jax.random.randint(k_x, (SEQ, BATCH), 0, DICT, dtype=jnp.int32)
    params = init_params(k_p, DICT, H, E, O)
    kparams = prepare_params(params)   # one-time weight folding (not per call)

    preds, logprobs, probs = classifier_forward(x, kparams)
    jax.block_until_ready((preds, logprobs, probs))

    r_preds, r_logp, r_probs = classifier_reference(x, params)
    assert jnp.array_equal(preds, r_preds.astype(preds.dtype))
    assert jnp.allclose(logprobs, r_logp, atol=1e-4, rtol=1e-4)
    assert jnp.allclose(probs, r_probs, atol=1e-4, rtol=1e-4)

    print("KERNEL_OK")
</pallas_src>

<mosaic_0001>
module attributes {stable_mosaic.version = 11 : i64} {
  func.func @rnn_classifier_kernel(%arg0: memref<16x1xi32, #tpu.memory_space<vmem>>, %arg1: memref<16x64xf32, #tpu.memory_space<vmem>>, %arg2: memref<32x32xf32, #tpu.memory_space<vmem>>, %arg3: memref<32x64xf32, #tpu.memory_space<vmem>>, %arg4: memref<64x8xf32, #tpu.memory_space<vmem>>, %arg5: memref<1x8xf32, #tpu.memory_space<vmem>>, %arg6: memref<2x8xf32, #tpu.memory_space<vmem>>) attributes {dimension_semantics = [], scalar_prefetch = 0 : i64, scratch_operands = 0 : i64, tpu.core_type = #tpu.core_type<tc>} {
    %c0 = arith.constant 0 : index
    %c0_0 = arith.constant 0 : index
    %0 = vector.load %arg0[%c0, %c0_0] : memref<16x1xi32, #tpu.memory_space<vmem>>, vector<16x1xi32>
    %1 = tpu.iota {dimensions = array<i32: 1>} : vector<16x16xi32>
    %2 = vector.broadcast %0 : vector<16x1xi32> to vector<16x16xi32>
    %3 = arith.cmpi eq, %1, %2 : vector<16x16xi32>
    %4 = arith.extui %3 : vector<16x16xi1> to vector<16x16xi32>
    %5 = arith.sitofp %4 : vector<16x16xi32> to vector<16x16xf32>
    %c0_1 = arith.constant 0 : index
    %c0_2 = arith.constant 0 : index
    %6 = vector.load %arg1[%c0_1, %c0_2] : memref<16x64xf32, #tpu.memory_space<vmem>>, vector<16x64xf32>
    %cst = arith.constant dense<0.000000e+00> : vector<16x64xf32>
    %7 = tpu.matmul %5, %6, %cst {dimension_numbers = #tpu.dot_dimension_numbers<[1], [0], [0], [1], [0, 0, 1, 1], [], []>} : vector<16x16xf32>, vector<16x64xf32>, vector<16x64xf32> -> vector<16x64xf32>
    %8 = vector.extract_strided_slice %7 {offsets = [0, 0], sizes = [2, 64], strides = [1, 1]} : vector<16x64xf32> to vector<2x64xf32>
    %9 = vector.extract_strided_slice %7 {offsets = [2, 0], sizes = [2, 64], strides = [1, 1]} : vector<16x64xf32> to vector<2x64xf32>
    %10 = vector.extract_strided_slice %7 {offsets = [4, 0], sizes = [2, 64], strides = [1, 1]} : vector<16x64xf32> to vector<2x64xf32>
    %11 = vector.extract_strided_slice %7 {offsets = [6, 0], sizes = [2, 64], strides = [1, 1]} : vector<16x64xf32> to vector<2x64xf32>
    %12 = vector.extract_strided_slice %7 {offsets = [8, 0], sizes = [2, 64], strides = [1, 1]} : vector<16x64xf32> to vector<2x64xf32>
    %13 = vector.extract_strided_slice %7 {offsets = [10, 0], sizes = [2, 64], strides = [1, 1]} : vector<16x64xf32> to vector<2x64xf32>
    %14 = vector.extract_strided_slice %7 {offsets = [12, 0], sizes = [2, 64], strides = [1, 1]} : vector<16x64xf32> to vector<2x64xf32>
    %15 = vector.extract_strided_slice %7 {offsets = [14, 0], sizes = [2, 64], strides = [1, 1]} : vector<16x64xf32> to vector<2x64xf32>
    %16 = arith.addf %8, %9 : vector<2x64xf32>
    %17 = arith.addf %16, %10 : vector<2x64xf32>
    %18 = arith.addf %17, %11 : vector<2x64xf32>
    %19 = arith.addf %18, %12 : vector<2x64xf32>
    %20 = arith.addf %19, %13 : vector<2x64xf32>
    %21 = arith.addf %20, %14 : vector<2x64xf32>
    %22 = arith.addf %21, %15 : vector<2x64xf32>
    %c0_3 = arith.constant 0 : index
    %c0_4 = arith.constant 0 : index
    %23 = vector.load %arg2[%c0_3, %c0_4] : memref<32x32xf32, #tpu.memory_space<vmem>>, vector<32x32xf32>
    %cst_5 = arith.constant 0.000000e+00 : f32
    %24 = vector.broadcast %cst_5 : f32 to vector<2x32xf32>
    %cst_6 = arith.constant 0.000000e+00 : f32
    %25 = vector.broadcast %cst_6 : f32 to vector<2x32xf32>
    %26 = arith.addf %25, %24 : vector<2x32xf32>
    %27 = vector.extract_strided_slice %8 {offsets = [0, 0], sizes = [2, 32], strides = [1, 1]} : vector<2x64xf32> to vector<2x32xf32>
    %cst_7 = arith.constant dense<0.000000e+00> : vector<2x32xf32>
    %28 = tpu.matmul %24, %23, %cst_7 {dimension_numbers = #tpu.dot_dimension_numbers<[1], [0], [0], [1], [0, 0, 1, 1], [], []>} : vector<2x32xf32>, vector<32x32xf32>, vector<2x32xf32> -> vector<2x32xf32>
    %29 = arith.addf %27, %28 : vector<2x32xf32>
    %30 = arith.addf %26, %29 : vector<2x32xf32>
    %31 = vector.extract_strided_slice %9 {offsets = [0, 0], sizes = [2, 32], strides = [1, 1]} : vector<2x64xf32> to vector<2x32xf32>
    %cst_8 = arith.constant dense<0.000000e+00> : vector<2x32xf32>
    %32 = tpu.matmul %29, %23, %cst_8 {dimension_numbers = #tpu.dot_dimension_numbers<[1], [0], [0], [1], [0, 0, 1, 1], [], []>} : vector<2x32xf32>, vector<32x32xf32>, vector<2x32xf32> -> vector<2x32xf32>
    %33 = arith.addf %31, %32 : vector<2x32xf32>
    %34 = arith.addf %30, %33 : vector<2x32xf32>
    %35 = vector.extract_strided_slice %10 {offsets = [0, 0], sizes = [2, 32], strides = [1, 1]} : vector<2x64xf32> to vector<2x32xf32>
    %cst_9 = arith.constant dense<0.000000e+00> : vector<2x32xf32>
    %36 = tpu.matmul %33, %23, %cst_9 {dimension_numbers = #tpu.dot_dimension_numbers<[1], [0], [0], [1], [0, 0, 1, 1], [], []>} : vector<2x32xf32>, vector<32x32xf32>, vector<2x32xf32> -> vector<2x32xf32>
    %37 = arith.addf %35, %36 : vector<2x32xf32>
    %38 = arith.addf %34, %37 : vector<2x32xf32>
    %39 = vector.extract_strided_slice %11 {offsets = [0, 0], sizes = [2, 32], strides = [1, 1]} : vector<2x64xf32> to vector<2x32xf32>
    %cst_10 = arith.constant dense<0.000000e+00> : vector<2x32xf32>
    %40 = tpu.matmul %37, %23, %cst_10 {dimension_numbers = #tpu.dot_dimension_numbers<[1], [0], [0], [1], [0, 0, 1, 1], [], []>} : vector<2x32xf32>, vector<32x32xf32>, vector<2x32xf32> -> vector<2x32xf32>
    %41 = arith.addf %39, %40 : vector<2x32xf32>
    %42 = arith.addf %38, %41 : vector<2x32xf32>
    %43 = vector.extract_strided_slice %12 {offsets = [0, 0], sizes = [2, 32], strides = [1, 1]} : vector<2x64xf32> to vector<2x32xf32>
    %cst_11 = arith.constant dense<0.000000e+00> : vector<2x32xf32>
    %44 = tpu.matmul %41, %23, %cst_11 {dimension_numbers = #tpu.dot_dimension_numbers<[1], [0], [0], [1], [0, 0, 1, 1], [], []>} : vector<2x32xf32>, vector<32x32xf32>, vector<2x32xf32> -> vector<2x32xf32>
    %45 = arith.addf %43, %44 : vector<2x32xf32>
    %46 = arith.addf %42, %45 : vector<2x32xf32>
    %47 = vector.extract_strided_slice %13 {offsets = [0, 0], sizes = [2, 32], strides = [1, 1]} : vector<2x64xf32> to vector<2x32xf32>
    %cst_12 = arith.constant dense<0.000000e+00> : vector<2x32xf32>
    %48 = tpu.matmul %45, %23, %cst_12 {dimension_numbers = #tpu.dot_dimension_numbers<[1], [0], [0], [1], [0, 0, 1, 1], [], []>} : vector<2x32xf32>, vector<32x32xf32>, vector<2x32xf32> -> vector<2x32xf32>
    %49 = arith.addf %47, %48 : vector<2x32xf32>
    %50 = arith.addf %46, %49 : vector<2x32xf32>
    %51 = vector.extract_strided_slice %14 {offsets = [0, 0], sizes = [2, 32], strides = [1, 1]} : vector<2x64xf32> to vector<2x32xf32>
    %cst_13 = arith.constant dense<0.000000e+00> : vector<2x32xf32>
    %52 = tpu.matmul %49, %23, %cst_13 {dimension_numbers = #tpu.dot_dimension_numbers<[1], [0], [0], [1], [0, 0, 1, 1], [], []>} : vector<2x32xf32>, vector<32x32xf32>, vector<2x32xf32> -> vector<2x32xf32>
    %53 = arith.addf %51, %52 : vector<2x32xf32>
    %54 = arith.addf %50, %53 : vector<2x32xf32>
    %c0_14 = arith.constant 0 : index
    %c0_15 = arith.constant 0 : index
    %55 = vector.load %arg3[%c0_14, %c0_15] : memref<32x64xf32, #tpu.memory_space<vmem>>, vector<32x64xf32>
    %cst_16 = arith.constant dense<0.000000e+00> : vector<2x64xf32>
    %56 = tpu.matmul %54, %55, %cst_16 {dimension_numbers = #tpu.dot_dimension_numbers<[1], [0], [0], [1], [0, 0, 1, 1], [], []>} : vector<2x32xf32>, vector<32x64xf32>, vector<2x64xf32> -> vector<2x64xf32>
    %57 = arith.addf %22, %56 : vector<2x64xf32>
    %cst_17 = arith.constant 1.250000e-01 : f32
    %58 = vector.broadcast %cst_17 : f32 to vector<2x64xf32>
    %59 = arith.mulf %57, %58 : vector<2x64xf32>
    %c0_18 = arith.constant 0 : index
    %c0_19 = arith.constant 0 : index
    %60 = vector.load %arg4[%c0_18, %c0_19] : memref<64x8xf32, #tpu.memory_space<vmem>>, vector<64x8xf32>
    %cst_20 = arith.constant dense<0.000000e+00> : vector<2x8xf32>
    %61 = tpu.matmul %59, %60, %cst_20 {dimension_numbers = #tpu.dot_dimension_numbers<[1], [0], [0], [1], [0, 0, 1, 1], [], []>} : vector<2x64xf32>, vector<64x8xf32>, vector<2x8xf32> -> vector<2x8xf32>
    %c0_21 = arith.constant 0 : index
    %c0_22 = arith.constant 0 : index
    %62 = vector.load %arg5[%c0_21, %c0_22] : memref<1x8xf32, #tpu.memory_space<vmem>>, vector<1x8xf32>
    %63 = vector.broadcast %62 : vector<1x8xf32> to vector<2x8xf32>
    %64 = arith.addf %61, %63 : vector<2x8xf32>
    %cst_23 = arith.constant dense<0xFF800000> : vector<2xf32>
    %65 = vector.multi_reduction <maximumf>, %64, %cst_23 [1] : vector<2x8xf32> to vector<2xf32>
    %66 = vector.shape_cast %65 : vector<2xf32> to vector<2x1xf32>
    %67 = vector.broadcast %66 : vector<2x1xf32> to vector<2x8xf32>
    %68 = arith.subf %64, %67 : vector<2x8xf32>
    %69 = math.exp %68 : vector<2x8xf32>
    %cst_24 = arith.constant dense<0.000000e+00> : vector<2xf32>
    %70 = vector.multi_reduction <add>, %69, %cst_24 [1] : vector<2x8xf32> to vector<2xf32>
    %71 = vector.shape_cast %70 : vector<2xf32> to vector<2x1xf32>
    %72 = math.log %71 : vector<2x1xf32>
    %73 = vector.broadcast %72 : vector<2x1xf32> to vector<2x8xf32>
    %74 = arith.subf %68, %73 : vector<2x8xf32>
    %c0_25 = arith.constant 0 : index
    %c0_26 = arith.constant 0 : index
    %75 = vector.load %arg6[%c0_25, %c0_26] : memref<2x8xf32, #tpu.memory_space<vmem>>, vector<2x8xf32>
    tpu.vector_store %arg6[%c0_25, %c0_26], %74 {strides = array<i32>} : memref<2x8xf32, #tpu.memory_space<vmem>>, vector<2x8xf32>,
    return
  }
}

</mosaic_0001>

<llo_original>
// kernel: tpu_custom_call.1
$region0: #{tpu_custom_call.1}
  #allocation0 [shape = 'u32[]', space=smem, size = 0x4, offset = 0x4, fixed_abs, tag = 'smem constant byte address 0x4 - core index']
  #allocation1 [shape = 'u32[144,128]{1,0:T(1,128)}', space=vmem, size = 0x12000, scoped, tag = 'internal scratch']
  %s0 = inlined_call_operand.vmem [shape: s32[16,1], index: 0, kind: input, shape index: {}]
  %s1 = inlined_call_operand.vmem [shape: f32[16,64], index: 1, kind: input, shape index: {}]
  %s2 = inlined_call_operand.vmem [shape: f32[32,32], index: 2, kind: input, shape index: {}]
  %s3 = inlined_call_operand.vmem [shape: f32[32,64], index: 3, kind: input, shape index: {}]
  %s4 = inlined_call_operand.vmem [shape: f32[64,8], index: 4, kind: input, shape index: {}]
  %s5 = inlined_call_operand.vmem [shape: f32[1,8], index: 5, kind: input, shape index: {}]
  %s6 = inlined_call_operand.hbm [shape: f32[2,8], index: 6, kind: output, shape index: {}]
  %s7 = sld [smem:[#allocation0]]
  $region34: #{tpu_custom_call.1} parent=0
    _
  %s9 = ssub.s32 1, %s7
  %s10 = scalar_select 0, %s9, %s7
  $region1: #{tpu_custom_call.1} parent=0
    #allocation2 [shape = 'u8[1024]{0}', space=vmem, size = 0x400, scoped, tag = 'output window, operand 0, single buffered']
    #allocation3 [shape = 's32[1]{0}', space=sflag, size = 0x4, scoped, tag = 'scoped memory for tpu_custom_call.1']
    %11 = vsyncpa [#allocation3], 0
    // Predicated region
    $region2: #{tpu_custom_call.1} parent=1 // pred_check
      _
    $region3: #{tpu_custom_call.1} parent=1 // pred_check_branch
      %13 = sbr.rel (0) target = $region5
    $region4: #{tpu_custom_call.1} parent=1 // pred_region
      _
    $region5: #{tpu_custom_call.1} parent=1 // pred_fallthru
      _
    // Predicated region
    $region6: #{tpu_custom_call.1} parent=1 // pred_check
      _
    $region7: #{tpu_custom_call.1} parent=1 // pred_check_branch
      %15 = sbr.rel (0) target = $region9
    $region8: #{tpu_custom_call.1} parent=1 // pred_region
      _
    $region9: #{tpu_custom_call.1} parent=1 // pred_fallthru
      _
    // Predicated region
    $region10: #{tpu_custom_call.1} parent=1 // pred_check
      _
    $region11: #{tpu_custom_call.1} parent=1 // pred_check_branch
      %17 = sbr.rel (0) target = $region13
    $region12: #{tpu_custom_call.1} parent=1 // pred_region
      _
    $region13: #{tpu_custom_call.1} parent=1 // pred_fallthru
      _
    // Predicated region
    $region14: #{tpu_custom_call.1} parent=1 // pred_check
      _
    $region15: #{tpu_custom_call.1} parent=1 // pred_check_branch
      %19 = sbr.rel (0) target = $region17
    $region16: #{tpu_custom_call.1} parent=1 // pred_region
      _
    $region17: #{tpu_custom_call.1} parent=1 // pred_fallthru
      _
    // Predicated region
    $region18: #{tpu_custom_call.1} parent=1 // pred_check
      _
    $region19: #{tpu_custom_call.1} parent=1 // pred_check_branch
      %21 = sbr.rel (0) target = $region21
    $region20: #{tpu_custom_call.1} parent=1 // pred_region
      _
    $region21: #{tpu_custom_call.1} parent=1 // pred_fallthru
      _
    // Predicated region
    $region22: #{tpu_custom_call.1} parent=1 // pred_check
      _
    $region23: #{tpu_custom_call.1} parent=1 // pred_check_branch
      %23 = sbr.rel (0) target = $region25
    $region24: #{tpu_custom_call.1} parent=1 // pred_region
      _
    $region25: #{tpu_custom_call.1} parent=1 // pred_fallthru
      _
    %v24 = vld [vmem:[%s0] sm:$0xff]
    %v25 = vld [vmem:[%s0 + $0x8] sm:$0xff]
    %v26 = vlaneseq
    %v27 = vand.u32 %v26, 127
    %28 = vset.pattern.permute.xlu0 0
    %29 = vperm.xlu0 %28, %v24
    %v30 = vpop.permute.xlu0 %29
    %31 = vset.pattern.permute.xlu0 0
    %32 = vperm.xlu0 %31, %v25
    %v33 = vpop.permute.xlu0 %32
    %vm34 = vcmp.eq.s32.totalorder %v27, %v30
    %vm35 = vcmp.eq.s32.totalorder %v27, %v33
    %v36 = vsel %vm34, 1, 0
    %v37 = vsel %vm35, 1, 0
    %v38 = vcvt.s32.f32 %v36
    %v39 = vcvt.s32.f32 %v37
    %v40 = vld [vmem:[%s1] sm:$0xff]
    %v41 = vld [vmem:[%s1 + $0x8] sm:$0xff]
    %vm42 = vcmask 130048
    %v44 = vsel %vm42, %v38, 0
    %v47 = vsel %vm42, %v39, 0
    %49 = vmatprep.subr.mxu0 0.0
    %50 = vmatpush1.msra.mxu0 %v40
    %51 = vmatprep.subr.mxu0 0.0
    %52 = vmatpush1.msra.mxu0 %v41
    %53 = vmatprep.subr.mxu0 0.0
    %54 = vmatpush1.msra.mxu0 0.0
    %55 = vmatprep.subr.mxu0 0.0
    %56 = vmatpush1.msra.mxu0 0.0
    %57 = vmatprep.subr.mxu0 0.0
    %58 = vmatpush1.msra.mxu0 0.0
    %59 = vmatprep.subr.mxu0 0.0
    %60 = vmatpush1.msra.mxu0 0.0
    %61 = vmatprep.subr.mxu0 0.0
    %62 = vmatpush1.msra.mxu0 0.0
    %63 = vmatprep.subr.mxu0 0.0
    %64 = vmatpush1.msra.mxu0 0.0
    %65 = vmatprep.subr.mxu0 0.0
    %66 = vmatpush1.msra.mxu0 0.0
    %67 = vmatprep.subr.mxu0 0.0
    %68 = vmatpush1.msra.mxu0 0.0
    %69 = vmatprep.subr.mxu0 0.0
    %70 = vmatpush1.msra.mxu0 0.0
    %71 = vmatprep.subr.mxu0 0.0
    %72 = vmatpush1.msra.mxu0 0.0
    %73 = vmatprep.subr.mxu0 0.0
    %74 = vmatpush1.msra.mxu0 0.0
    %75 = vmatprep.subr.mxu0 0.0
    %76 = vmatpush1.msra.mxu0 0.0
    %77 = vmatprep.subr.mxu0 0.0
    %78 = vmatpush1.msra.mxu0 0.0
    %79 = vmatprep.subr.mxu0 0.0
    %80 = vmatpush1.msra.mxu0 0.0
    %81 = vmatprep.subr.mxu0 0.0
    %82 = vmatpush1.msra.mxu0 0.0
    %83 = vmatprep.subr.mxu0 0.0
    %84 = vmatpush1.msra.mxu0 0.0
    %85 = vmatprep.subr.mxu0 0.0
    %86 = vmatpush1.msra.mxu0 0.0
    %87 = vmatprep.subr.mxu0 0.0
    %88 = vmatpush1.msra.mxu0 0.0
    %89 = vmatprep.subr.mxu0 0.0
    %90 = vmatpush1.msra.mxu0 0.0
    %91 = vmatprep.subr.mxu0 0.0
    %92 = vmatpush1.msra.mxu0 0.0
    %93 = vmatprep.subr.mxu0 0.0
    %94 = vmatpush1.msra.mxu0 0.0
    %95 = vmatprep.subr.mxu0 0.0
    %96 = vmatpush1.msra.mxu0 0.0
    %97 = vmatprep.subr.mxu0 0.0
    %98 = vmatpush1.msra.mxu0 0.0
    %99 = vmatprep.subr.mxu0 0.0
    %100 = vmatpush1.msra.mxu0 0.0
    %101 = vmatprep.subr.mxu0 0.0
    %102 = vmatpush1.msra.mxu0 0.0
    %103 = vmatprep.subr.mxu0 0.0
    %104 = vmatpush1.msra.mxu0 0.0
    %105 = vmatprep.subr.mxu0 0.0
    %106 = vmatpush1.msra.mxu0 0.0
    %107 = vmatprep.subr.mxu0 0.0
    %108 = vmatpush1.msra.mxu0 0.0
    %109 = vmatprep.subr.mxu0 0.0
    %110 = vmatpush1.msra.mxu0 0.0
    %111 = vmatprep.subr.mxu0 0.0
    %112 = vmatpush1.msra.mxu0 0.0
    %113 = vmatprep.mubr.f32.mxu0 0.0
    %114 = vmatmul.mubr.f32.gmra.mrb[0].mxu0 %v44
    %v115 = vpop.f32.mrb[0].mxu0
    %v116 = vadd.f32 0.0, %v115
    %v117 = vpop.f32.mrb[0].mxu0
    %118 = vmatprep.mubr.f32.mxu0 0.0
    %119 = vmatmul.mubr.f32.gmra.mrb[0].mxu0 %v47
    %v120 = vpop.f32.mrb[0].mxu0
    %v121 = vadd.f32 0.0, %v120
    %v122 = vpop.f32.mrb[0].mxu0
    %123 = vdwg.mxu0
    %v125 = vrot.slane %v116, 2
    %v127 = vadd.f32 %v116, %v125
    %v128 = vrot.slane %v116, 4
    %v130 = vadd.f32 %v127, %v128
    %v131 = vrot.slane %v116, 6
    %v133 = vadd.f32 %v130, %v131
    %v134 = vadd.f32 %v133, %v121
    %v136 = vrot.slane %v121, 2
    %v138 = vadd.f32 %v134, %v136
    %v139 = vrot.slane %v121, 4
    %v141 = vadd.f32 %v138, %v139
    %v142 = vrot.slane %v121, 6
    %v144 = vadd.f32 %v141, %v142
    %v145 = vld [vmem:[%s2] sm:$0xff]
    %v146 = vld [vmem:[%s2 + $0x8] sm:$0xff]
    %v147 = vld [vmem:[%s2 + $0x10] sm:$0xff]
    %v148 = vld [vmem:[%s2 + $0x18] sm:$0xff]
    %vm149 = vcmask 261120
    %v151 = vsel %vm149, 0.0, 0
    %153 = vmatprep.subr.mxu0 0.0
    %154 = vmatpush1.msra.mxu0 %v145
    %155 = vmatprep.subr.mxu0 0.0
    %156 = vmatpush1.msra.mxu0 %v146
    %157 = vmatprep.subr.mxu0 0.0
    %158 = vmatpush1.msra.mxu0 %v147
    %159 = vmatprep.subr.mxu0 0.0
    %160 = vmatpush1.msra.mxu0 %v148
    %161 = vmatprep.subr.mxu0 0.0
    %162 = vmatpush1.msra.mxu0 0.0
    %163 = vmatprep.subr.mxu0 0.0
    %164 = vmatpush1.msra.mxu0 0.0
    %165 = vmatprep.subr.mxu0 0.0
    %166 = vmatpush1.msra.mxu0 0.0
    %167 = vmatprep.subr.mxu0 0.0
    %168 = vmatpush1.msra.mxu0 0.0
    %169 = vmatprep.subr.mxu0 0.0
    %170 = vmatpush1.msra.mxu0 0.0
    %171 = vmatprep.subr.mxu0 0.0
    %172 = vmatpush1.msra.mxu0 0.0
    %173 = vmatprep.subr.mxu0 0.0
    %174 = vmatpush1.msra.mxu0 0.0
    %175 = vmatprep.subr.mxu0 0.0
    %176 = vmatpush1.msra.mxu0 0.0
    %177 = vmatprep.subr.mxu0 0.0
    %178 = vmatpush1.msra.mxu0 0.0
    %179 = vmatprep.subr.mxu0 0.0
    %180 = vmatpush1.msra.mxu0 0.0
    %181 = vmatprep.subr.mxu0 0.0
    %182 = vmatpush1.msra.mxu0 0.0
    %183 = vmatprep.subr.mxu0 0.0
    %184 = vmatpush1.msra.mxu0 0.0
    %185 = vmatprep.subr.mxu0 0.0
    %186 = vmatpush1.msra.mxu0 0.0
    %187 = vmatprep.subr.mxu0 0.0
    %188 = vmatpush1.msra.mxu0 0.0
    %189 = vmatprep.subr.mxu0 0.0
    %190 = vmatpush1.msra.mxu0 0.0
    %191 = vmatprep.subr.mxu0 0.0
    %192 = vmatpush1.msra.mxu0 0.0
    %193 = vmatprep.subr.mxu0 0.0
    %194 = vmatpush1.msra.mxu0 0.0
    %195 = vmatprep.subr.mxu0 0.0
    %196 = vmatpush1.msra.mxu0 0.0
    %197 = vmatprep.subr.mxu0 0.0
    %198 = vmatpush1.msra.mxu0 0.0
    %199 = vmatprep.subr.mxu0 0.0
    %200 = vmatpush1.msra.mxu0 0.0
    %201 = vmatprep.subr.mxu0 0.0
    %202 = vmatpush1.msra.mxu0 0.0
    %203 = vmatprep.subr.mxu0 0.0
    %204 = vmatpush1.msra.mxu0 0.0
    %205 = vmatprep.subr.mxu0 0.0
    %206 = vmatpush1.msra.mxu0 0.0
    %207 = vmatprep.subr.mxu0 0.0
    %208 = vmatpush1.msra.mxu0 0.0
    %209 = vmatprep.subr.mxu0 0.0
    %210 = vmatpush1.msra.mxu0 0.0
    %211 = vmatprep.subr.mxu0 0.0
    %212 = vmatpush1.msra.mxu0 0.0
    %213 = vmatprep.subr.mxu0 0.0
    %214 = vmatpush1.msra.mxu0 0.0
    %215 = vmatprep.subr.mxu0 0.0
    %216 = vmatpush1.msra.mxu0 0.0
    %217 = vmatprep.mubr.f32.mxu0 0.0
    %218 = vmatmul.mubr.f32.gmra.mrb[0].mxu0 %v151
    %v219 = vpop.f32.mrb[0].mxu0
    %v220 = vadd.f32 0.0, %v219
    %v221 = vpop.f32.mrb[0].mxu0
    %222 = vdwg.mxu0
    %v223 = vadd.f32 %v116, %v220
    %v224 = vadd.f32 %v223, 0.0
    %v226 = vsel %vm149, %v223, 0
    %228 = vmatprep.subr.mxu0 0.0
    %229 = vmatpush1.msra.mxu0 %v145
    %230 = vmatprep.subr.mxu0 0.0
    %231 = vmatpush1.msra.mxu0 %v146
    %232 = vmatprep.subr.mxu0 0.0
    %233 = vmatpush1.msra.mxu0 %v147
    %234 = vmatprep.subr.mxu0 0.0
    %235 = vmatpush1.msra.mxu0 %v148
    %236 = vmatprep.subr.mxu0 0.0
    %237 = vmatpush1.msra.mxu0 0.0
    %238 = vmatprep.subr.mxu0 0.0
    %239 = vmatpush1.msra.mxu0 0.0
    %240 = vmatprep.subr.mxu0 0.0
    %241 = vmatpush1.msra.mxu0 0.0
    %242 = vmatprep.subr.mxu0 0.0
    %243 = vmatpush1.msra.mxu0 0.0
    %244 = vmatprep.subr.mxu0 0.0
    %245 = vmatpush1.msra.mxu0 0.0
    %246 = vmatprep.subr.mxu0 0.0
    %247 = vmatpush1.msra.mxu0 0.0
    %248 = vmatprep.subr.mxu0 0.0
    %249 = vmatpush1.msra.mxu0 0.0
    %250 = vmatprep.subr.mxu0 0.0
    %251 = vmatpush1.msra.mxu0 0.0
    %252 = vmatprep.subr.mxu0 0.0
    %253 = vmatpush1.msra.mxu0 0.0
    %254 = vmatprep.subr.mxu0 0.0
    %255 = vmatpush1.msra.mxu0 0.0
    %256 = vmatprep.subr.mxu0 0.0
    %257 = vmatpush1.msra.mxu0 0.0
    %258 = vmatprep.subr.mxu0 0.0
    %259 = vmatpush1.msra.mxu0 0.0
    %260 = vmatprep.subr.mxu0 0.0
    %261 = vmatpush1.msra.mxu0 0.0
    %262 = vmatprep.subr.mxu0 0.0
    %263 = vmatpush1.msra.mxu0 0.0
    %264 = vmatprep.subr.mxu0 0.0
    %265 = vmatpush1.msra.mxu0 0.0
    %266 = vmatprep.subr.mxu0 0.0
    %267 = vmatpush1.msra.mxu0 0.0
    %268 = vmatprep.subr.mxu0 0.0
    %269 = vmatpush1.msra.mxu0 0.0
    %270 = vmatprep.subr.mxu0 0.0
    %271 = vmatpush1.msra.mxu0 0.0
    %272 = vmatprep.subr.mxu0 0.0
    %273 = vmatpush1.msra.mxu0 0.0
    %274 = vmatprep.subr.mxu0 0.0
    %275 = vmatpush1.msra.mxu0 0.0
    %276 = vmatprep.subr.mxu0 0.0
    %277 = vmatpush1.msra.mxu0 0.0
    %278 = vmatprep.subr.mxu0 0.0
    %279 = vmatpush1.msra.mxu0 0.0
    %280 = vmatprep.subr.mxu0 0.0
    %281 = vmatpush1.msra.mxu0 0.0
    %282 = vmatprep.subr.mxu0 0.0
    %283 = vmatpush1.msra.mxu0 0.0
    %284 = vmatprep.subr.mxu0 0.0
    %285 = vmatpush1.msra.mxu0 0.0
    %286 = vmatprep.subr.mxu0 0.0
    %287 = vmatpush1.msra.mxu0 0.0
    %288 = vmatprep.subr.mxu0 0.0
    %289 = vmatpush1.msra.mxu0 0.0
    %290 = vmatprep.subr.mxu0 0.0
    %291 = vmatpush1.msra.mxu0 0.0
    %292 = vmatprep.mubr.f32.mxu0 0.0
    %293 = vmatmul.mubr.f32.gmra.mrb[0].mxu0 %v226
    %v294 = vpop.f32.mrb[0].mxu0
    %v295 = vadd.f32 0.0, %v294
    %v296 = vpop.f32.mrb[0].mxu0
    %297 = vdwg.mxu0
    %v299 = vrot.slane %v295, 6
    %v301 = vadd.f32 %v116, %v299
    %v303 = vrot.slane %v301, 2
    %v305 = vadd.f32 %v224, %v303
    %v306 = vsel %vm149, %v303, 0
    %308 = vmatprep.subr.mxu0 0.0
    %309 = vmatpush1.msra.mxu0 %v145
    %310 = vmatprep.subr.mxu0 0.0
    %311 = vmatpush1.msra.mxu0 %v146
    %312 = vmatprep.subr.mxu0 0.0
    %313 = vmatpush1.msra.mxu0 %v147
    %314 = vmatprep.subr.mxu0 0.0
    %315 = vmatpush1.msra.mxu0 %v148
    %316 = vmatprep.subr.mxu0 0.0
    %317 = vmatpush1.msra.mxu0 0.0
    %318 = vmatprep.subr.mxu0 0.0
    %319 = vmatpush1.msra.mxu0 0.0
    %320 = vmatprep.subr.mxu0 0.0
    %321 = vmatpush1.msra.mxu0 0.0
    %322 = vmatprep.subr.mxu0 0.0
    %323 = vmatpush1.msra.mxu0 0.0
    %324 = vmatprep.subr.mxu0 0.0
    %325 = vmatpush1.msra.mxu0 0.0
    %326 = vmatprep.subr.mxu0 0.0
    %327 = vmatpush1.msra.mxu0 0.0
    %328 = vmatprep.subr.mxu0 0.0
    %329 = vmatpush1.msra.mxu0 0.0
    %330 = vmatprep.subr.mxu0 0.0
    %331 = vmatpush1.msra.mxu0 0.0
    %332 = vmatprep.subr.mxu0 0.0
    %333 = vmatpush1.msra.mxu0 0.0
    %334 = vmatprep.subr.mxu0 0.0
    %335 = vmatpush1.msra.mxu0 0.0
    %336 = vmatprep.subr.mxu0 0.0
    %337 = vmatpush1.msra.mxu0 0.0
    %338 = vmatprep.subr.mxu0 0.0
    %339 = vmatpush1.msra.mxu0 0.0
    %340 = vmatprep.subr.mxu0 0.0
    %341 = vmatpush1.msra.mxu0 0.0
    %342 = vmatprep.subr.mxu0 0.0
    %343 = vmatpush1.msra.mxu0 0.0
    %344 = vmatprep.subr.mxu0 0.0
    %345 = vmatpush1.msra.mxu0 0.0
    %346 = vmatprep.subr.mxu0 0.0
    %347 = vmatpush1.msra.mxu0 0.0
    %348 = vmatprep.subr.mxu0 0.0
    %349 = vmatpush1.msra.mxu0 0.0
    %350 = vmatprep.subr.mxu0 0.0
    %351 = vmatpush1.msra.mxu0 0.0
    %352 = vmatprep.subr.mxu0 0.0
    %353 = vmatpush1.msra.mxu0 0.0
    %354 = vmatprep.subr.mxu0 0.0
    %355 = vmatpush1.msra.mxu0 0.0
    %356 = vmatprep.subr.mxu0 0.0
    %357 = vmatpush1.msra.mxu0 0.0
    %358 = vmatprep.subr.mxu0 0.0
    %359 = vmatpush1.msra.mxu0 0.0
    %360 = vmatprep.subr.mxu0 0.0
    %361 = vmatpush1.msra.mxu0 0.0
    %362 = vmatprep.subr.mxu0 0.0
    %363 = vmatpush1.msra.mxu0 0.0
    %364 = vmatprep.subr.mxu0 0.0
    %365 = vmatpush1.msra.mxu0 0.0
    %366 = vmatprep.subr.mxu0 0.0
    %367 = vmatpush1.msra.mxu0 0.0
    %368 = vmatprep.subr.mxu0 0.0
    %369 = vmatpush1.msra.mxu0 0.0
    %370 = vmatprep.subr.mxu0 0.0
    %371 = vmatpush1.msra.mxu0 0.0
    %372 = vmatprep.mubr.f32.mxu0 0.0
    %373 = vmatmul.mubr.f32.gmra.mrb[0].mxu0 %v306
    %v374 = vpop.f32.mrb[0].mxu0
    %v375 = vadd.f32 0.0, %v374
    %v376 = vpop.f32.mrb[0].mxu0
    %377 = vdwg.mxu0
    %v379 = vrot.slane %v375, 4
    %v381 = vadd.f32 %v116, %v379
    %v383 = vrot.slane %v381, 4
    %v385 = vadd.f32 %v305, %v383
    %v386 = vsel %vm149, %v383, 0
    %388 = vmatprep.subr.mxu0 0.0
    %389 = vmatpush1.msra.mxu0 %v145
    %390 = vmatprep.subr.mxu0 0.0
    %391 = vmatpush1.msra.mxu0 %v146
    %392 = vmatprep.subr.mxu0 0.0
    %393 = vmatpush1.msra.mxu0 %v147
    %394 = vmatprep.subr.mxu0 0.0
    %395 = vmatpush1.msra.mxu0 %v148
    %396 = vmatprep.subr.mxu0 0.0
    %397 = vmatpush1.msra.mxu0 0.0
    %398 = vmatprep.subr.mxu0 0.0
    %399 = vmatpush1.msra.mxu0 0.0
    %400 = vmatprep.subr.mxu0 0.0
    %401 = vmatpush1.msra.mxu0 0.0
    %402 = vmatprep.subr.mxu0 0.0
    %403 = vmatpush1.msra.mxu0 0.0
    %404 = vmatprep.subr.mxu0 0.0
    %405 = vmatpush1.msra.mxu0 0.0
    %406 = vmatprep.subr.mxu0 0.0
    %407 = vmatpush1.msra.mxu0 0.0
    %408 = vmatprep.subr.mxu0 0.0
    %409 = vmatpush1.msra.mxu0 0.0
    %410 = vmatprep.subr.mxu0 0.0
    %411 = vmatpush1.msra.mxu0 0.0
    %412 = vmatprep.subr.mxu0 0.0
    %413 = vmatpush1.msra.mxu0 0.0
    %414 = vmatprep.subr.mxu0 0.0
    %415 = vmatpush1.msra.mxu0 0.0
    %416 = vmatprep.subr.mxu0 0.0
    %417 = vmatpush1.msra.mxu0 0.0
    %418 = vmatprep.subr.mxu0 0.0
    %419 = vmatpush1.msra.mxu0 0.0
    %420 = vmatprep.subr.mxu0 0.0
    %421 = vmatpush1.msra.mxu0 0.0
    %422 = vmatprep.subr.mxu0 0.0
    %423 = vmatpush1.msra.mxu0 0.0
    %424 = vmatprep.subr.mxu0 0.0
    %425 = vmatpush1.msra.mxu0 0.0
    %426 = vmatprep.subr.mxu0 0.0
    %427 = vmatpush1.msra.mxu0 0.0
    %428 = vmatprep.subr.mxu0 0.0
    %429 = vmatpush1.msra.mxu0 0.0
    %430 = vmatprep.subr.mxu0 0.0
    %431 = vmatpush1.msra.mxu0 0.0
    %432 = vmatprep.subr.mxu0 0.0
    %433 = vmatpush1.msra.mxu0 0.0
    %434 = vmatprep.subr.mxu0 0.0
    %435 = vmatpush1.msra.mxu0 0.0
    %436 = vmatprep.subr.mxu0 0.0
    %437 = vmatpush1.msra.mxu0 0.0
    %438 = vmatprep.subr.mxu0 0.0
    %439 = vmatpush1.msra.mxu0 0.0
    %440 = vmatprep.subr.mxu0 0.0
    %441 = vmatpush1.msra.mxu0 0.0
    %442 = vmatprep.subr.mxu0 0.0
    %443 = vmatpush1.msra.mxu0 0.0
    %444 = vmatprep.subr.mxu0 0.0
    %445 = vmatpush1.msra.mxu0 0.0
    %446 = vmatprep.subr.mxu0 0.0
    %447 = vmatpush1.msra.mxu0 0.0
    %448 = vmatprep.subr.mxu0 0.0
    %449 = vmatpush1.msra.mxu0 0.0
    %450 = vmatprep.subr.mxu0 0.0
    %451 = vmatpush1.msra.mxu0 0.0
    %452 = vmatprep.mubr.f32.mxu0 0.0
    %453 = vmatmul.mubr.f32.gmra.mrb[0].mxu0 %v386
    %v454 = vpop.f32.mrb[0].mxu0
    %v455 = vadd.f32 0.0, %v454
    %v456 = vpop.f32.mrb[0].mxu0
    %457 = vdwg.mxu0
    %v459 = vrot.slane %v455, 2
    %v461 = vadd.f32 %v116, %v459
    %v463 = vrot.slane %v461, 6
    %v465 = vadd.f32 %v385, %v463
    %v466 = vsel %vm149, %v463, 0
    %468 = vmatprep.subr.mxu0 0.0
    %469 = vmatpush1.msra.mxu0 %v145
    %470 = vmatprep.subr.mxu0 0.0
    %471 = vmatpush1.msra.mxu0 %v146
    %472 = vmatprep.subr.mxu0 0.0
    %473 = vmatpush1.msra.mxu0 %v147
    %474 = vmatprep.subr.mxu0 0.0
    %475 = vmatpush1.msra.mxu0 %v148
    %476 = vmatprep.subr.mxu0 0.0
    %477 = vmatpush1.msra.mxu0 0.0
    %478 = vmatprep.subr.mxu0 0.0
    %479 = vmatpush1.msra.mxu0 0.0
    %480 = vmatprep.subr.mxu0 0.0
    %481 = vmatpush1.msra.mxu0 0.0
    %482 = vmatprep.subr.mxu0 0.0
    %483 = vmatpush1.msra.mxu0 0.0
    %484 = vmatprep.subr.mxu0 0.0
    %485 = vmatpush1.msra.mxu0 0.0
    %486 = vmatprep.subr.mxu0 0.0
    %487 = vmatpush1.msra.mxu0 0.0
    %488 = vmatprep.subr.mxu0 0.0
    %489 = vmatpush1.msra.mxu0 0.0
    %490 = vmatprep.subr.mxu0 0.0
    %491 = vmatpush1.msra.mxu0 0.0
    %492 = vmatprep.subr.mxu0 0.0
    %493 = vmatpush1.msra.mxu0 0.0
    %494 = vmatprep.subr.mxu0 0.0
    %495 = vmatpush1.msra.mxu0 0.0
    %496 = vmatprep.subr.mxu0 0.0
    %497 = vmatpush1.msra.mxu0 0.0
    %498 = vmatprep.subr.mxu0 0.0
    %499 = vmatpush1.msra.mxu0 0.0
    %500 = vmatprep.subr.mxu0 0.0
    %501 = vmatpush1.msra.mxu0 0.0
    %502 = vmatprep.subr.mxu0 0.0
    %503 = vmatpush1.msra.mxu0 0.0
    %504 = vmatprep.subr.mxu0 0.0
    %505 = vmatpush1.msra.mxu0 0.0
    %506 = vmatprep.subr.mxu0 0.0
    %507 = vmatpush1.msra.mxu0 0.0
    %508 = vmatprep.subr.mxu0 0.0
    %509 = vmatpush1.msra.mxu0 0.0
    %510 = vmatprep.subr.mxu0 0.0
    %511 = vmatpush1.msra.mxu0 0.0
    %512 = vmatprep.subr.mxu0 0.0
    %513 = vmatpush1.msra.mxu0 0.0
    %514 = vmatprep.subr.mxu0 0.0
    %515 = vmatpush1.msra.mxu0 0.0
    %516 = vmatprep.subr.mxu0 0.0
    %517 = vmatpush1.msra.mxu0 0.0
    %518 = vmatprep.subr.mxu0 0.0
    %519 = vmatpush1.msra.mxu0 0.0
    %520 = vmatprep.subr.mxu0 0.0
    %521 = vmatpush1.msra.mxu0 0.0
    %522 = vmatprep.subr.mxu0 0.0
    %523 = vmatpush1.msra.mxu0 0.0
    %524 = vmatprep.subr.mxu0 0.0
    %525 = vmatpush1.msra.mxu0 0.0
    %526 = vmatprep.subr.mxu0 0.0
    %527 = vmatpush1.msra.mxu0 0.0
    %528 = vmatprep.subr.mxu0 0.0
    %529 = vmatpush1.msra.mxu0 0.0
    %530 = vmatprep.subr.mxu0 0.0
    %531 = vmatpush1.msra.mxu0 0.0
    %532 = vmatprep.mubr.f32.mxu0 0.0
    %533 = vmatmul.mubr.f32.gmra.mrb[0].mxu0 %v466
    %v534 = vpop.f32.mrb[0].mxu0
    %v535 = vadd.f32 0.0, %v534
    %v536 = vpop.f32.mrb[0].mxu0
    %537 = vdwg.mxu0
    %v538 = vadd.f32 %v121, %v535
    %v539 = vadd.f32 %v465, %v538
    %v541 = vsel %vm149, %v538, 0
    %543 = vmatprep.subr.mxu0 0.0
    %544 = vmatpush1.msra.mxu0 %v145
    %545 = vmatprep.subr.mxu0 0.0
    %546 = vmatpush1.msra.mxu0 %v146
    %547 = vmatprep.subr.mxu0 0.0
    %548 = vmatpush1.msra.mxu0 %v147
    %549 = vmatprep.subr.mxu0 0.0
    %550 = vmatpush1.msra.mxu0 %v148
    %551 = vmatprep.subr.mxu0 0.0
    %552 = vmatpush1.msra.mxu0 0.0
    %553 = vmatprep.subr.mxu0 0.0
    %554 = vmatpush1.msra.mxu0 0.0
    %555 = vmatprep.subr.mxu0 0.0
    %556 = vmatpush1.msra.mxu0 0.0
    %557 = vmatprep.subr.mxu0 0.0
    %558 = vmatpush1.msra.mxu0 0.0
    %559 = vmatprep.subr.mxu0 0.0
    %560 = vmatpush1.msra.mxu0 0.0
    %561 = vmatprep.subr.mxu0 0.0
    %562 = vmatpush1.msra.mxu0 0.0
    %563 = vmatprep.subr.mxu0 0.0
    %564 = vmatpush1.msra.mxu0 0.0
    %565 = vmatprep.subr.mxu0 0.0
    %566 = vmatpush1.msra.mxu0 0.0
    %567 = vmatprep.subr.mxu0 0.0
    %568 = vmatpush1.msra.mxu0 0.0
    %569 = vmatprep.subr.mxu0 0.0
    %570 = vmatpush1.msra.mxu0 0.0
    %571 = vmatprep.subr.mxu0 0.0
    %572 = vmatpush1.msra.mxu0 0.0
    %573 = vmatprep.subr.mxu0 0.0
    %574 = vmatpush1.msra.mxu0 0.0
    %575 = vmatprep.subr.mxu0 0.0
    %576 = vmatpush1.msra.mxu0 0.0
    %577 = vmatprep.subr.mxu0 0.0
    %578 = vmatpush1.msra.mxu0 0.0
    %579 = vmatprep.subr.mxu0 0.0
    %580 = vmatpush1.msra.mxu0 0.0
    %581 = vmatprep.subr.mxu0 0.0
    %582 = vmatpush1.msra.mxu0 0.0
    %583 = vmatprep.subr.mxu0 0.0
    %584 = vmatpush1.msra.mxu0 0.0
    %585 = vmatprep.subr.mxu0 0.0
    %586 = vmatpush1.msra.mxu0 0.0
    %587 = vmatprep.subr.mxu0 0.0
    %588 = vmatpush1.msra.mxu0 0.0
    %589 = vmatprep.subr.mxu0 0.0
    %590 = vmatpush1.msra.mxu0 0.0
    %591 = vmatprep.subr.mxu0 0.0
    %592 = vmatpush1.msra.mxu0 0.0
    %593 = vmatprep.subr.mxu0 0.0
    %594 = vmatpush1.msra.mxu0 0.0
    %595 = vmatprep.subr.mxu0 0.0
    %596 = vmatpush1.msra.mxu0 0.0
    %597 = vmatprep.subr.mxu0 0.0
    %598 = vmatpush1.msra.mxu0 0.0
    %599 = vmatprep.subr.mxu0 0.0
    %600 = vmatpush1.msra.mxu0 0.0
    %601 = vmatprep.subr.mxu0 0.0
    %602 = vmatpush1.msra.mxu0 0.0
    %603 = vmatprep.subr.mxu0 0.0
    %604 = vmatpush1.msra.mxu0 0.0
    %605 = vmatprep.subr.mxu0 0.0
    %606 = vmatpush1.msra.mxu0 0.0
    %607 = vmatprep.mubr.f32.mxu0 0.0
    %608 = vmatmul.mubr.f32.gmra.mrb[0].mxu0 %v541
    %v609 = vpop.f32.mrb[0].mxu0
    %v610 = vadd.f32 0.0, %v609
    %v611 = vpop.f32.mrb[0].mxu0
    %612 = vdwg.mxu0
    %v614 = vrot.slane %v610, 6
    %v616 = vadd.f32 %v121, %v614
    %v618 = vrot.slane %v616, 2
    %v620 = vadd.f32 %v539, %v618
    %v621 = vsel %vm149, %v618, 0
    %623 = vmatprep.subr.mxu0 0.0
    %624 = vmatpush1.msra.mxu0 %v145
    %625 = vmatprep.subr.mxu0 0.0
    %626 = vmatpush1.msra.mxu0 %v146
    %627 = vmatprep.subr.mxu0 0.0
    %628 = vmatpush1.msra.mxu0 %v147
    %629 = vmatprep.subr.mxu0 0.0
    %630 = vmatpush1.msra.mxu0 %v148
    %631 = vmatprep.subr.mxu0 0.0
    %632 = vmatpush1.msra.mxu0 0.0
    %633 = vmatprep.subr.mxu0 0.0
    %634 = vmatpush1.msra.mxu0 0.0
    %635 = vmatprep.subr.mxu0 0.0
    %636 = vmatpush1.msra.mxu0 0.0
    %637 = vmatprep.subr.mxu0 0.0
    %638 = vmatpush1.msra.mxu0 0.0
    %639 = vmatprep.subr.mxu0 0.0
    %640 = vmatpush1.msra.mxu0 0.0
    %641 = vmatprep.subr.mxu0 0.0
    %642 = vmatpush1.msra.mxu0 0.0
    %643 = vmatprep.subr.mxu0 0.0
    %644 = vmatpush1.msra.mxu0 0.0
    %645 = vmatprep.subr.mxu0 0.0
    %646 = vmatpush1.msra.mxu0 0.0
    %647 = vmatprep.subr.mxu0 0.0
    %648 = vmatpush1.msra.mxu0 0.0
    %649 = vmatprep.subr.mxu0 0.0
    %650 = vmatpush1.msra.mxu0 0.0
    %651 = vmatprep.subr.mxu0 0.0
    %652 = vmatpush1.msra.mxu0 0.0
    %653 = vmatprep.subr.mxu0 0.0
    %654 = vmatpush1.msra.mxu0 0.0
    %655 = vmatprep.subr.mxu0 0.0
    %656 = vmatpush1.msra.mxu0 0.0
    %657 = vmatprep.subr.mxu0 0.0
    %658 = vmatpush1.msra.mxu0 0.0
    %659 = vmatprep.subr.mxu0 0.0
    %660 = vmatpush1.msra.mxu0 0.0
    %661 = vmatprep.subr.mxu0 0.0
    %662 = vmatpush1.msra.mxu0 0.0
    %663 = vmatprep.subr.mxu0 0.0
    %664 = vmatpush1.msra.mxu0 0.0
    %665 = vmatprep.subr.mxu0 0.0
    %666 = vmatpush1.msra.mxu0 0.0
    %667 = vmatprep.subr.mxu0 0.0
    %668 = vmatpush1.msra.mxu0 0.0
    %669 = vmatprep.subr.mxu0 0.0
    %670 = vmatpush1.msra.mxu0 0.0
    %671 = vmatprep.subr.mxu0 0.0
    %672 = vmatpush1.msra.mxu0 0.0
    %673 = vmatprep.subr.mxu0 0.0
    %674 = vmatpush1.msra.mxu0 0.0
    %675 = vmatprep.subr.mxu0 0.0
    %676 = vmatpush1.msra.mxu0 0.0
    %677 = vmatprep.subr.mxu0 0.0
    %678 = vmatpush1.msra.mxu0 0.0
    %679 = vmatprep.subr.mxu0 0.0
    %680 = vmatpush1.msra.mxu0 0.0
    %681 = vmatprep.subr.mxu0 0.0
    %682 = vmatpush1.msra.mxu0 0.0
    %683 = vmatprep.subr.mxu0 0.0
    %684 = vmatpush1.msra.mxu0 0.0
    %685 = vmatprep.subr.mxu0 0.0
    %686 = vmatpush1.msra.mxu0 0.0
    %687 = vmatprep.mubr.f32.mxu0 0.0
    %688 = vmatmul.mubr.f32.gmra.mrb[0].mxu0 %v621
    %v689 = vpop.f32.mrb[0].mxu0
    %v690 = vadd.f32 0.0, %v689
    %v691 = vpop.f32.mrb[0].mxu0
    %692 = vdwg.mxu0
    %v694 = vrot.slane %v690, 4
    %v696 = vadd.f32 %v121, %v694
    %v698 = vrot.slane %v696, 4
    %v700 = vadd.f32 %v620, %v698
    %v701 = vld [vmem:[%s3] sm:$0xff]
    %v702 = vld [vmem:[%s3 + $0x8] sm:$0xff]
    %v703 = vld [vmem:[%s3 + $0x10] sm:$0xff]
    %v704 = vld [vmem:[%s3 + $0x18] sm:$0xff]
    %v706 = vsel %vm149, %v700, 0
    %708 = vmatprep.subr.mxu0 0.0
    %709 = vmatpush1.msra.mxu0 %v701
    %710 = vmatprep.subr.mxu0 0.0
    %711 = vmatpush1.msra.mxu0 %v702
    %712 = vmatprep.subr.mxu0 0.0
    %713 = vmatpush1.msra.mxu0 %v703
    %714 = vmatprep.subr.mxu0 0.0
    %715 = vmatpush1.msra.mxu0 %v704
    %716 = vmatprep.subr.mxu0 0.0
    %717 = vmatpush1.msra.mxu0 0.0
    %718 = vmatprep.subr.mxu0 0.0
    %719 = vmatpush1.msra.mxu0 0.0
    %720 = vmatprep.subr.mxu0 0.0
    %721 = vmatpush1.msra.mxu0 0.0
    %722 = vmatprep.subr.mxu0 0.0
    %723 = vmatpush1.msra.mxu0 0.0
    %724 = vmatprep.subr.mxu0 0.0
    %725 = vmatpush1.msra.mxu0 0.0
    %726 = vmatprep.subr.mxu0 0.0
    %727 = vmatpush1.msra.mxu0 0.0
    %728 = vmatprep.subr.mxu0 0.0
    %729 = vmatpush1.msra.mxu0 0.0
    %730 = vmatprep.subr.mxu0 0.0
    %731 = vmatpush1.msra.mxu0 0.0
    %732 = vmatprep.subr.mxu0 0.0
    %733 = vmatpush1.msra.mxu0 0.0
    %734 = vmatprep.subr.mxu0 0.0
    %735 = vmatpush1.msra.mxu0 0.0
    %736 = vmatprep.subr.mxu0 0.0
    %737 = vmatpush1.msra.mxu0 0.0
    %738 = vmatprep.subr.mxu0 0.0
    %739 = vmatpush1.msra.mxu0 0.0
    %740 = vmatprep.subr.mxu0 0.0
    %741 = vmatpush1.msra.mxu0 0.0
    %742 = vmatprep.subr.mxu0 0.0
    %743 = vmatpush1.msra.mxu0 0.0
    %744 = vmatprep.subr.mxu0 0.0
    %745 = vmatpush1.msra.mxu0 0.0
    %746 = vmatprep.subr.mxu0 0.0
    %747 = vmatpush1.msra.mxu0 0.0
    %748 = vmatprep.subr.mxu0 0.0
    %749 = vmatpush1.msra.mxu0 0.0
    %750 = vmatprep.subr.mxu0 0.0
    %751 = vmatpush1.msra.mxu0 0.0
    %752 = vmatprep.subr.mxu0 0.0
    %753 = vmatpush1.msra.mxu0 0.0
    %754 = vmatprep.subr.mxu0 0.0
    %755 = vmatpush1.msra.mxu0 0.0
    %756 = vmatprep.subr.mxu0 0.0
    %757 = vmatpush1.msra.mxu0 0.0
    %758 = vmatprep.subr.mxu0 0.0
    %759 = vmatpush1.msra.mxu0 0.0
    %760 = vmatprep.subr.mxu0 0.0
    %761 = vmatpush1.msra.mxu0 0.0
    %762 = vmatprep.subr.mxu0 0.0
    %763 = vmatpush1.msra.mxu0 0.0
    %764 = vmatprep.subr.mxu0 0.0
    %765 = vmatpush1.msra.mxu0 0.0
    %766 = vmatprep.subr.mxu0 0.0
    %767 = vmatpush1.msra.mxu0 0.0
    %768 = vmatprep.subr.mxu0 0.0
    %769 = vmatpush1.msra.mxu0 0.0
    %770 = vmatprep.subr.mxu0 0.0
    %771 = vmatpush1.msra.mxu0 0.0
    %772 = vmatprep.mubr.f32.mxu0 0.0
    %773 = vmatmul.mubr.f32.gmra.mrb[0].mxu0 %v706
    %v774 = vpop.f32.mrb[0].mxu0
    %v775 = vadd.f32 0.0, %v774
    %v776 = vpop.f32.mrb[0].mxu0
    %777 = vdwg.mxu0
    %v778 = vadd.f32 %v144, %v775
    %v779 = vmul.f32 %v778, 0.125
    %v780 = vld [vmem:[%s4] sm:$0xff]
    %v781 = vld [vmem:[%s4 + $0x8] sm:$0xff]
    %v782 = vld [vmem:[%s4 + $0x10] sm:$0xff]
    %v783 = vld [vmem:[%s4 + $0x18] sm:$0xff]
    %v784 = vld [vmem:[%s4 + $0x20] sm:$0xff]
    %v785 = vld [vmem:[%s4 + $0x28] sm:$0xff]
    %v786 = vld [vmem:[%s4 + $0x30] sm:$0xff]
    %v787 = vld [vmem:[%s4 + $0x38] sm:$0xff]
    %v788 = vld [vmem:[%s5] sm:$0x1]
    %v790 = vlaneseq
    %v791 = vshrl.u32 %v790, 7
    %v792 = vsub.s32 0, %v791
    %v793 = vrot.slane %v788, %v792
    %vm795 = vcmask 523264
    %v797 = vsel %vm795, %v779, 0
    %799 = vmatprep.subr.mxu0 0.0
    %800 = vmatpush1.msra.mxu0 %v780
    %801 = vmatprep.subr.mxu0 0.0
    %802 = vmatpush1.msra.mxu0 %v781
    %803 = vmatprep.subr.mxu0 0.0
    %804 = vmatpush1.msra.mxu0 %v782
    %805 = vmatprep.subr.mxu0 0.0
    %806 = vmatpush1.msra.mxu0 %v783
    %807 = vmatprep.subr.mxu0 0.0
    %808 = vmatpush1.msra.mxu0 %v784
    %809 = vmatprep.subr.mxu0 0.0
    %810 = vmatpush1.msra.mxu0 %v785
    %811 = vmatprep.subr.mxu0 0.0
    %812 = vmatpush1.msra.mxu0 %v786
    %813 = vmatprep.subr.mxu0 0.0
    %814 = vmatpush1.msra.mxu0 %v787
    %815 = vmatprep.subr.mxu0 0.0
    %816 = vmatpush1.msra.mxu0 0.0
    %817 = vmatprep.subr.mxu0 0.0
    %818 = vmatpush1.msra.mxu0 0.0
    %819 = vmatprep.subr.mxu0 0.0
    %820 = vmatpush1.msra.mxu0 0.0
    %821 = vmatprep.subr.mxu0 0.0
    %822 = vmatpush1.msra.mxu0 0.0
    %823 = vmatprep.subr.mxu0 0.0
    %824 = vmatpush1.msra.mxu0 0.0
    %825 = vmatprep.subr.mxu0 0.0
    %826 = vmatpush1.msra.mxu0 0.0
    %827 = vmatprep.subr.mxu0 0.0
    %828 = vmatpush1.msra.mxu0 0.0
    %829 = vmatprep.subr.mxu0 0.0
    %830 = vmatpush1.msra.mxu0 0.0
    %831 = vmatprep.subr.mxu0 0.0
    %832 = vmatpush1.msra.mxu0 0.0
    %833 = vmatprep.subr.mxu0 0.0
    %834 = vmatpush1.msra.mxu0 0.0
    %835 = vmatprep.subr.mxu0 0.0
    %836 = vmatpush1.msra.mxu0 0.0
    %837 = vmatprep.subr.mxu0 0.0
    %838 = vmatpush1.msra.mxu0 0.0
    %839 = vmatprep.subr.mxu0 0.0
    %840 = vmatpush1.msra.mxu0 0.0
    %841 = vmatprep.subr.mxu0 0.0
    %842 = vmatpush1.msra.mxu0 0.0
    %843 = vmatprep.subr.mxu0 0.0
    %844 = vmatpush1.msra.mxu0 0.0
    %845 = vmatprep.subr.mxu0 0.0
    %846 = vmatpush1.msra.mxu0 0.0
    %847 = vmatprep.subr.mxu0 0.0
    %848 = vmatpush1.msra.mxu0 0.0
    %849 = vmatprep.subr.mxu0 0.0
    %850 = vmatpush1.msra.mxu0 0.0
    %851 = vmatprep.subr.mxu0 0.0
    %852 = vmatpush1.msra.mxu0 0.0
    %853 = vmatprep.subr.mxu0 0.0
    %854 = vmatpush1.msra.mxu0 0.0
    %855 = vmatprep.subr.mxu0 0.0
    %856 = vmatpush1.msra.mxu0 0.0
    %857 = vmatprep.subr.mxu0 0.0
    %858 = vmatpush1.msra.mxu0 0.0
    %859 = vmatprep.subr.mxu0 0.0
    %860 = vmatpush1.msra.mxu0 0.0
    %861 = vmatprep.subr.mxu0 0.0
    %862 = vmatpush1.msra.mxu0 0.0
    %863 = vmatprep.mubr.f32.mxu0 0.0
    %864 = vmatmul.mubr.f32.gmra.mrb[0].mxu0 %v797
    %v865 = vpop.f32.mrb[0].mxu0
    %v866 = vadd.f32 %v793, %v865
    %v867 = vpop.f32.mrb[0].mxu0
    %868 = vdwg.mxu0
    %vm869 = vcmask 58368
    %v870 = vsel %vm869, %v866, -inf
    %871 = vmax.xlane.f32.xlu0 %v870
    %v872 = vpop.xlane.xlu0 %871
    %v873 = vsub.f32 %v866, %v872
    %v874 = vmul.f32 %v873, 1.442695
    %v875 = vpow.pop %v874
    %v876 = vsel %vm869, %v875, 0.0
    %877 = vadd.xlane.f32.xlu0 %v876
    %v878 = vpop.xlane.xlu0 %877
    %v879 = vlog2.pop %v878
    %v880 = vmul.f32 %v879, 0.6931472
    %v881 = vsub.f32 %v873, %v880
    %882 = vst.msk [vmem:[#allocation2] sm:$0x3] %vm869, %v881
    // Predicated region
    $region26: #{tpu_custom_call.1} parent=1 // pred_check
      _
    $region27: #{tpu_custom_call.1} parent=1 // pred_check_branch
      %884 = sbr.rel (0) target = $region29
    $region28: #{tpu_custom_call.1} parent=1 // pred_region
      %s886 = ssub.s32 32, 32
      %887 = vsyncadd [#allocation3], %s886
      %s889 = sshll.u32 [#allocation2], 4
      %s890 = int_to_ptr.vmem [resolvable:$true] %s889
      %892 = dma.vmem_to_hbm [thread:$0]  %s890, 32, %s6, [#allocation3]
    $region29: #{tpu_custom_call.1} parent=1 // pred_fallthru
      _
    // Predicated region
    $region30: #{tpu_custom_call.1} parent=1 // pred_check
      _
    $region31: #{tpu_custom_call.1} parent=1 // pred_check_branch
      %894 = sbr.rel (0) target = $region33
    $region32: #{tpu_custom_call.1} parent=1 // pred_region
      %895 = dma.done [#allocation3], 32
    $region33: #{tpu_custom_call.1} parent=1 // pred_fallthru
      _
    %896 = vsyncpa [#allocation3], 1

</llo_original>
